<compile_context>
chip_gen: v7x
topology: tpu7x:2x2x1
jax: 0.10.0
libtpu: 0.0.40
codegen_flags: <defaults>
</compile_context>

<pallas_src>
import functools

import jax
import jax.numpy as jnp
from jax.experimental import pallas as pl
from jax.experimental.pallas import tpu as pltpu

EPS = 1e-4
NEG_SLOPE = 0.01


def _round_up(v, m):
    return (v + m - 1) // m * m


def _bn_leaky_relu(y, n_real, eps, neg_slope):
    """Training-mode BatchNorm1d (affine=False, biased variance) + leaky_relu on an f32
    (n_pad, tn) tile.  Rows >= n_real are zero padding and are masked out of the stats."""
    inv_n = jnp.float32(1.0 / n_real)
    mean = jnp.sum(y, axis=0, keepdims=True) * inv_n            # padded rows are zero
    row = jax.lax.broadcasted_iota(jnp.int32, y.shape, 0)
    centered = jnp.where(row < n_real, y - mean, 0.0)           # two-pass variance
    var = jnp.sum(centered * centered, axis=0, keepdims=True) * inv_n
    y_norm = (y - mean) * jax.lax.rsqrt(var + eps)
    return jnp.where(y_norm >= 0, y_norm, neg_slope * y_norm)


def _kernel_whole_k(x_ref, w_ref, o_ref, *, n_real, eps, neg_slope):
    # x block has a constant index_map -> DMA'd once, resident across all out-feature tiles.
    y = jnp.dot(x_ref[...], w_ref[...], preferred_element_type=jnp.float32)
    o_ref[...] = _bn_leaky_relu(y, n_real, eps, neg_slope).astype(o_ref.dtype)


def _kernel_k_tiled(x_ref, w_ref, o_ref, *, n_real, eps, neg_slope):
    # o_ref (f32, index_map (0, j)) is resident across k -> it IS the accumulator.
    k = pl.program_id(1)

    @pl.when(k == 0)
    def _():
        o_ref[...] = jnp.zeros_like(o_ref)

    o_ref[...] += jnp.dot(x_ref[...], w_ref[...], preferred_element_type=jnp.float32)

    @pl.when(k == pl.num_programs(1) - 1)
    def _():
        o_ref[...] = _bn_leaky_relu(o_ref[...], n_real, eps, neg_slope).astype(o_ref.dtype)


def _vmem_budget_bytes():
    try:
        cap = int(pltpu.get_tpu_info().vmem_capacity_bytes)
    except Exception:
        cap = 64 * 1024 * 1024  # conservative fallback (v7x per-core VMEM)
    # Use ~3/4 of physical VMEM, capped, with a floor at the old 32 MiB scoped default.
    return max(32 * 1024 * 1024, min(int(cap * 0.75), 96 * 1024 * 1024))


def _largest_div_tile(total, desired):
    """Largest multiple of 128 <= desired that divides `total` (total is a 128-multiple)."""
    t = max(128, (min(desired, total) // 128) * 128)
    while total % t:
        t -= 128
    return t


def linear_bn_leaky_relu(x, w_t, *, tn=256, tk=512, eps=EPS, neg_slope=NEG_SLOPE,
                         compute_dtype=jnp.bfloat16,
                         x_resident_bytes=8 * 1024 * 1024):
    """x: (N, in_features); w_t: (in_features, out_features). Returns f32 (N, out_features)."""
    n, in_f = x.shape
    in_f2, out_f = w_t.shape
    assert in_f == in_f2

    itemsize = jnp.dtype(compute_dtype).itemsize
    sub = 32 // itemsize                       # packed sublanes per vreg: 8 f32 / 16 bf16
    n_pad = _round_up(n, sub)
    k_pad = _round_up(in_f, 128)
    o_pad = _round_up(out_f, 128)

    # ---- tile selection -------------------------------------------------------------
    tn = _largest_div_tile(o_pad, tn)
    if o_pad // tn < 2 and o_pad >= 256:
        # Guarantee >= 2 parallel out-feature tiles so v7x's two TensorCores both work.
        half = o_pad // 2
        tn = half if half % 128 == 0 else 128
    tk = _largest_div_tile(k_pad, tk)

    vmem_budget = _vmem_budget_bytes()
    tile_budget = vmem_budget - (4 << 20)      # headroom for compiler-internal scratch

    x_bytes = n_pad * k_pad * itemsize
    whole_k = (2 * x_bytes) <= min(x_resident_bytes, tile_budget // 2)

    def footprint(tn_, tk_, whole):
        if whole:
            return 2 * x_bytes + 2 * k_pad * tn_ * itemsize + 2 * n_pad * tn_ * 4
        return 2 * n_pad * tk_ * itemsize + 2 * tk_ * tn_ * itemsize + 2 * n_pad * tn_ * 4

    while whole_k and footprint(tn, tk, True) > tile_budget and tn > 128:
        tn = _largest_div_tile(o_pad, tn - 128)
    if whole_k and footprint(tn, tk, True) > tile_budget:
        whole_k = False
    while footprint(tn, tk, whole_k) > tile_budget and tk > 128:
        tk = _largest_div_tile(k_pad, tk - 128)
    while footprint(tn, tk, whole_k) > tile_budget and tn > 128:
        tn = _largest_div_tile(o_pad, tn - 128)

    # ---- cast + (only if ragged) pad ------------------------------------------------
    # TODO(synk): for repeated calls, pre-pad/cast the weight once outside the hot path.
    x_c = x.astype(compute_dtype)
    if (n_pad, k_pad) != (n, in_f):
        x_c = jnp.pad(x_c, ((0, n_pad - n), (0, k_pad - in_f)))
    w_c = w_t.astype(compute_dtype)
    if (k_pad, o_pad) != (in_f, out_f):
        w_c = jnp.pad(w_c, ((0, k_pad - in_f), (0, o_pad - out_f)))

    cost = pl.CostEstimate(
        flops=2 * n_pad * k_pad * o_pad,
        transcendentals=o_pad,
        bytes_accessed=(n_pad * k_pad + k_pad * o_pad) * itemsize + n_pad * o_pad * 4,
    )

    # ---- pallas_call ----------------------------------------------------------------
    if whole_k:
        kernel = functools.partial(_kernel_whole_k, n_real=n, eps=eps, neg_slope=neg_slope)
        grid = (o_pad // tn,)
        in_specs = [
            pl.BlockSpec((n_pad, k_pad), lambda j: (0, 0)),   # x: resident across all j
            pl.BlockSpec((k_pad, tn), lambda j: (0, j)),      # W: streamed per out-tile
        ]
        out_specs = pl.BlockSpec((n_pad, tn), lambda j: (0, j))
        dim_sem = ("parallel",)
    else:
        kernel = functools.partial(_kernel_k_tiled, n_real=n, eps=eps, neg_slope=neg_slope)
        grid = (o_pad // tn, k_pad // tk)
        in_specs = [
            pl.BlockSpec((n_pad, tk), lambda j, k: (0, k)),   # x: full batch, K tile
            pl.BlockSpec((tk, tn), lambda j, k: (k, j)),      # W: (K tile, out tile)
        ]
        out_specs = pl.BlockSpec((n_pad, tn), lambda j, k: (0, j))
        dim_sem = ("parallel", "arbitrary")

    out_pad = pl.pallas_call(
        kernel,
        out_shape=jax.ShapeDtypeStruct((n_pad, o_pad), jnp.float32),
        grid_spec=pltpu.PrefetchScalarGridSpec(
            num_scalar_prefetch=0,
            grid=grid,
            in_specs=in_specs,
            out_specs=out_specs,
        ),
        compiler_params=pltpu.CompilerParams(
            dimension_semantics=dim_sem,
            vmem_limit_bytes=vmem_budget,
        ),
        cost_estimate=cost,
    )(x_c, w_c)

    return out_pad[:n, :out_f]


def _reference(x, w_t, compute_dtype=jnp.bfloat16, eps=EPS, neg_slope=NEG_SLOPE):
    """Pure-JAX reference of the same math (bf16 matmul, f32 BN + leaky_relu)."""
    y = jnp.dot(x.astype(compute_dtype), w_t.astype(compute_dtype),
                preferred_element_type=jnp.float32)
    m = y.mean(axis=0, keepdims=True)
    v = ((y - m) ** 2).mean(axis=0, keepdims=True)
    yn = (y - m) * jax.lax.rsqrt(v + eps)
    return jnp.where(yn >= 0, yn, neg_slope * yn)


if __name__ == "__main__":
    key = jax.random.PRNGKey(0)
    kx, kw, kx2, kw2, kx3, kw3 = jax.random.split(key, 6)

    # Test 1: typical small MLP block (whole-K fast path, ragged pad path).
    batch, in_features, out_features = 8, 16, 32
    x = jax.random.normal(kx, (batch, in_features), dtype=jnp.float32)
    bound = 1.0 / (in_features ** 0.5)
    w = jax.random.uniform(kw, (out_features, in_features), jnp.float32, -bound, bound)
    out = linear_bn_leaky_relu(x, w.T)
    jax.block_until_ready(out)
    assert out.shape == (batch, out_features)
    ref = _reference(x, w.T)
    assert jnp.allclose(out, ref, atol=1e-2, rtol=1e-2), float(jnp.max(jnp.abs(out - ref)))

    # Test 2: force the (parallel j, arbitrary k) accumulate-into-output path.
    b2, in2, out2 = 16, 384, 256
    x2 = jax.random.normal(kx2, (b2, in2), dtype=jnp.float32)
    bound2 = 1.0 / (in2 ** 0.5)
    w2 = jax.random.uniform(kw2, (out2, in2), jnp.float32, -bound2, bound2)
    out2_res = linear_bn_leaky_relu(x2, w2.T, tn=128, tk=128, x_resident_bytes=0)
    jax.block_until_ready(out2_res)
    ref2 = _reference(x2, w2.T)
    assert jnp.allclose(out2_res, ref2, atol=1e-2, rtol=1e-2), \
        float(jnp.max(jnp.abs(out2_res - ref2)))

    # Test 3: already-aligned shapes (no pad copy), multiple parallel out-feature tiles.
    b3, in3, out3 = 32, 256, 512
    x3 = jax.random.normal(kx3, (b3, in3), dtype=jnp.float32)
    bound3 = 1.0 / (in3 ** 0.5)
    w3 = jax.random.uniform(kw3, (out3, in3), jnp.float32, -bound3, bound3)
    out3_res = linear_bn_leaky_relu(x3, w3.T)
    jax.block_until_ready(out3_res)
    ref3 = _reference(x3, w3.T)
    assert jnp.allclose(out3_res, ref3, atol=1e-2, rtol=1e-2), \
        float(jnp.max(jnp.abs(out3_res - ref3)))

    print("KERNEL_OK")
</pallas_src>

<mosaic_0001>
module attributes {stable_mosaic.version = 11 : i64} {
  func.func @_kernel_whole_k(%arg0: i32, %arg1: memref<16x128xbf16, #tpu.memory_space<vmem>>, %arg2: memref<128x128xbf16, #tpu.memory_space<vmem>>, %arg3: memref<16x128xf32, #tpu.memory_space<vmem>>) attributes {dimension_semantics = [#tpu.dimension_semantics<parallel>], iteration_bounds = array<i64: 1>, scalar_prefetch = 0 : i64, scratch_operands = 0 : i64, tpu.core_type = #tpu.core_type<tc>, window_params = [{pipeline_mode = #tpu.pipeline_mode<synchronous>, transform_indices = @transform_0, window_bounds = array<i64: 16, 128>}, {transform_indices = @transform_1, window_bounds = array<i64: 128, 128>}, {transform_indices = @transform_2, window_bounds = array<i64: 16, 128>}]} {
    %c0 = arith.constant 0 : index
    %c0_0 = arith.constant 0 : index
    %0 = vector.load %arg1[%c0, %c0_0] : memref<16x128xbf16, #tpu.memory_space<vmem>>, vector<16x128xbf16>
    %c0_1 = arith.constant 0 : index
    %c0_2 = arith.constant 0 : index
    %1 = vector.load %arg2[%c0_1, %c0_2] : memref<128x128xbf16, #tpu.memory_space<vmem>>, vector<128x128xbf16>
    %cst = arith.constant dense<0.000000e+00> : vector<16x128xf32>
    %2 = tpu.matmul %0, %1, %cst {dimension_numbers = #tpu.dot_dimension_numbers<[1], [0], [0], [1], [0, 0, 1, 1], [], []>} : vector<16x128xbf16>, vector<128x128xbf16>, vector<16x128xf32> -> vector<16x128xf32>
    %cst_3 = arith.constant dense<0.000000e+00> : vector<128xf32>
    %3 = vector.multi_reduction <add>, %2, %cst_3 [0] : vector<16x128xf32> to vector<128xf32>
    %4 = vector.shape_cast %3 : vector<128xf32> to vector<1x128xf32>
    %cst_4 = arith.constant 1.250000e-01 : f32
    %5 = vector.broadcast %cst_4 : f32 to vector<1x128xf32>
    %6 = arith.mulf %4, %5 : vector<1x128xf32>
    %7 = tpu.iota {dimensions = array<i32: 0>} : vector<16x128xi32>
    %c8_i32 = arith.constant 8 : i32
    %8 = vector.broadcast %c8_i32 : i32 to vector<16x128xi32>
    %9 = arith.cmpi slt, %7, %8 : vector<16x128xi32>
    %10 = vector.broadcast %6 : vector<1x128xf32> to vector<16x128xf32>
    %11 = arith.subf %2, %10 : vector<16x128xf32>
    %cst_5 = arith.constant 0.000000e+00 : f32
    %12 = vector.broadcast %cst_5 : f32 to vector<16x128xf32>
    %13 = arith.select %9, %11, %12 : vector<16x128xi1>, vector<16x128xf32>
    %14 = arith.mulf %13, %13 : vector<16x128xf32>
    %cst_6 = arith.constant dense<0.000000e+00> : vector<128xf32>
    %15 = vector.multi_reduction <add>, %14, %cst_6 [0] : vector<16x128xf32> to vector<128xf32>
    %16 = vector.shape_cast %15 : vector<128xf32> to vector<1x128xf32>
    %cst_7 = arith.constant 1.250000e-01 : f32
    %17 = vector.broadcast %cst_7 : f32 to vector<1x128xf32>
    %18 = arith.mulf %16, %17 : vector<1x128xf32>
    %19 = vector.broadcast %6 : vector<1x128xf32> to vector<16x128xf32>
    %20 = arith.subf %2, %19 : vector<16x128xf32>
    %cst_8 = arith.constant 9.99999974E-5 : f32
    %21 = vector.broadcast %cst_8 : f32 to vector<1x128xf32>
    %22 = arith.addf %18, %21 : vector<1x128xf32>
    %23 = math.rsqrt %22 : vector<1x128xf32>
    %24 = vector.broadcast %23 : vector<1x128xf32> to vector<16x128xf32>
    %25 = arith.mulf %20, %24 : vector<16x128xf32>
    %cst_9 = arith.constant 0.000000e+00 : f32
    %26 = vector.broadcast %cst_9 : f32 to vector<16x128xf32>
    %27 = arith.cmpf oge, %25, %26 : vector<16x128xf32>
    %cst_10 = arith.constant 0.00999999977 : f32
    %28 = vector.broadcast %cst_10 : f32 to vector<16x128xf32>
    %29 = arith.mulf %28, %25 : vector<16x128xf32>
    %30 = arith.select %27, %25, %29 : vector<16x128xi1>, vector<16x128xf32>
    %c0_11 = arith.constant 0 : index
    %c0_12 = arith.constant 0 : index
    %31 = vector.load %arg3[%c0_11, %c0_12] : memref<16x128xf32, #tpu.memory_space<vmem>>, vector<16x128xf32>
    tpu.vector_store %arg3[%c0_11, %c0_12], %30 {strides = array<i32>} : memref<16x128xf32, #tpu.memory_space<vmem>>, vector<16x128xf32>,
    return
  }
  func.func @transform_0(%arg0: i32) -> (i32, i32) {
    %c0_i32 = arith.constant 0 : i32
    %c0_i32_0 = arith.constant 0 : i32
    %c0_i32_1 = arith.constant 0 : i32
    return %c0_i32, %c0_i32_0 : i32, i32
  }
  func.func @transform_1(%arg0: i32) -> (i32, i32) {
    %c0_i32 = arith.constant 0 : i32
    %c0_i32_0 = arith.constant 0 : i32
    return %c0_i32, %arg0 : i32, i32
  }
  func.func @transform_2(%arg0: i32) -> (i32, i32) {
    %c0_i32 = arith.constant 0 : i32
    %c0_i32_0 = arith.constant 0 : i32
    return %c0_i32, %arg0 : i32, i32
  }
}

</mosaic_0001>

<llo_original>
// kernel: tpu_custom_call.1
$region0: #{tpu_custom_call.1}
  #allocation0 [shape = 'u32[]', space=smem, size = 0x4, offset = 0x4, fixed_abs, tag = 'smem constant byte address 0x4 - core index']
  #allocation1 [shape = 'u32[144,128]{1,0:T(1,128)}', space=vmem, size = 0x12000, scoped, tag = 'internal scratch']
  %s0 = inlined_call_operand.hbm [shape: bf16[16,128], index: 0, kind: input, shape index: {}]
  %s1 = inlined_call_operand.hbm [shape: bf16[128,128], index: 1, kind: input, shape index: {}]
  %s2 = inlined_call_operand.hbm [shape: f32[16,128], index: 2, kind: output, shape index: {}]
  %s3 = sld [smem:[#allocation0]]
  $region26: #{tpu_custom_call.1} parent=0
    _
  %s5 = ssub.s32 1, %s3
  %s6 = scalar_select 0, %s5, %s3
  $region1: #{tpu_custom_call.1} parent=0
    #allocation2 [shape = 'u8[4096]{0}', space=vmem, size = 0x1000, scoped, tag = 'input window, operand 0, single buffered']
    #allocation3 [shape = 's32[1]{0}', space=sflag, size = 0x4, scoped, tag = 'scoped memory for tpu_custom_call.1']
    #allocation4 [shape = 's32[1]{0}', space=sflag, size = 0x4, scoped, tag = 'scoped memory for tpu_custom_call.1']
    #allocation5 [shape = 'u8[32768]{0}', space=vmem, size = 0x8000, scoped, tag = 'input window, operand 1, single buffered']
    #allocation6 [shape = 's32[1]{0}', space=sflag, size = 0x4, scoped, tag = 'scoped memory for tpu_custom_call.1']
    #allocation7 [shape = 'u8[8192]{0}', space=vmem, size = 0x2000, scoped, tag = 'output window, operand 0, single buffered']
    %7 = vsyncpa [#allocation3], 0
    %8 = vsyncpa [#allocation6], 0
    %9 = vsyncpa [#allocation4], 0
    // Predicated region
    $region2: #{tpu_custom_call.1} parent=1 // pred_check
      _
    $region3: #{tpu_custom_call.1} parent=1 // pred_check_branch
      %11 = sbr.rel (0) target = $region5
    $region4: #{tpu_custom_call.1} parent=1 // pred_region
      %s13 = ssub.s32 128, 128
      %14 = vsyncadd [#allocation3], %s13
      %s15 = sshll.u32 [#allocation2], 4
      %s16 = int_to_ptr.vmem [resolvable:$true] %s15
      %21 = dma.hbm_to_vmem [thread:$0]  %s0, 128, %s16, [#allocation3], 64, 64, 4
    $region5: #{tpu_custom_call.1} parent=1 // pred_fallthru
      _
    // Predicated region
    $region6: #{tpu_custom_call.1} parent=1 // pred_check
      _
    $region7: #{tpu_custom_call.1} parent=1 // pred_check_branch
      %23 = sbr.rel (0) target = $region9
    $region8: #{tpu_custom_call.1} parent=1 // pred_region
      %s25 = ssub.s32 1024, 1024
      %26 = vsyncadd [#allocation6], %s25
      %s27 = sshll.u32 [#allocation5], 4
      %s28 = int_to_ptr.vmem [resolvable:$true] %s27
      %33 = dma.hbm_to_vmem [thread:$0]  %s1, 1024, %s28, [#allocation6], 64, 64, 4
    $region9: #{tpu_custom_call.1} parent=1 // pred_fallthru
      _
    // Predicated region
    $region10: #{tpu_custom_call.1} parent=1 // pred_check
      _
    $region11: #{tpu_custom_call.1} parent=1 // pred_check_branch
      %35 = sbr.rel (0) target = $region13
    $region12: #{tpu_custom_call.1} parent=1 // pred_region
      %36 = dma.done [#allocation3], 128
    $region13: #{tpu_custom_call.1} parent=1 // pred_fallthru
      _
    // Predicated region
    $region14: #{tpu_custom_call.1} parent=1 // pred_check
      _
    $region15: #{tpu_custom_call.1} parent=1 // pred_check_branch
      %38 = sbr.rel (0) target = $region17
    $region16: #{tpu_custom_call.1} parent=1 // pred_region
      %39 = dma.done [#allocation6], 1024
    $region17: #{tpu_custom_call.1} parent=1 // pred_fallthru
      _
    %v41 = vld [vmem:[#allocation2] sm:$0xf]
    %v42 = vld [vmem:[#allocation2 + $0x4] sm:$0xf]
    %v43 = vld [vmem:[#allocation5] sm:$0xf]
    %v44 = vld [vmem:[#allocation5 + $0x4] sm:$0xf]
    %v45 = vld [vmem:[#allocation5 + $0x8] sm:$0xf]
    %v46 = vld [vmem:[#allocation5 + $0xc] sm:$0xf]
    %v47 = vld [vmem:[#allocation5 + $0x10] sm:$0xf]
    %v48 = vld [vmem:[#allocation5 + $0x14] sm:$0xf]
    %v49 = vld [vmem:[#allocation5 + $0x18] sm:$0xf]
    %v50 = vld [vmem:[#allocation5 + $0x1c] sm:$0xf]
    %v51 = vld [vmem:[#allocation5 + $0x20] sm:$0xf]
    %v52 = vld [vmem:[#allocation5 + $0x24] sm:$0xf]
    %v53 = vld [vmem:[#allocation5 + $0x28] sm:$0xf]
    %v54 = vld [vmem:[#allocation5 + $0x2c] sm:$0xf]
    %v55 = vld [vmem:[#allocation5 + $0x30] sm:$0xf]
    %v56 = vld [vmem:[#allocation5 + $0x34] sm:$0xf]
    %v57 = vld [vmem:[#allocation5 + $0x38] sm:$0xf]
    %v58 = vld [vmem:[#allocation5 + $0x3c] sm:$0xf]
    %v61 = vunpack.c.l.b16 %v41
    %v62 = vunpack.c.l.b16 %v42
    %v63 = vpack.c.b16 %v62, %v61
    %v81 = vunpack.c.l.b16 %v43
    %v82 = vunpack.c.l.b16 %v44
    %v83 = vunpack.c.l.b16 %v45
    %v84 = vunpack.c.l.b16 %v46
    %v85 = vunpack.c.l.b16 %v47
    %v86 = vunpack.c.l.b16 %v48
    %v87 = vunpack.c.l.b16 %v49
    %v88 = vunpack.c.l.b16 %v50
    %v89 = vunpack.c.l.b16 %v51
    %v90 = vunpack.c.l.b16 %v52
    %v91 = vunpack.c.l.b16 %v53
    %v92 = vunpack.c.l.b16 %v54
    %v93 = vunpack.c.l.b16 %v55
    %v94 = vunpack.c.l.b16 %v56
    %v95 = vunpack.c.l.b16 %v57
    %v96 = vunpack.c.l.b16 %v58
    %v97 = vpack.c.b16 %v82, %v81
    %v98 = vpack.c.b16 %v84, %v83
    %v99 = vpack.c.b16 %v86, %v85
    %v100 = vpack.c.b16 %v88, %v87
    %v101 = vpack.c.b16 %v90, %v89
    %v102 = vpack.c.b16 %v92, %v91
    %v103 = vpack.c.b16 %v94, %v93
    %v104 = vpack.c.b16 %v96, %v95
    %113 = vmatprep.subr.bf16.mxu0 0
    %114 = vmatpush1.bf16.msra.mxu0 %v97
    %115 = vmatprep.subr.bf16.mxu0 0
    %116 = vmatpush1.bf16.msra.mxu0 %v98
    %117 = vmatprep.subr.bf16.mxu0 0
    %118 = vmatpush1.bf16.msra.mxu0 %v99
    %119 = vmatprep.subr.bf16.mxu0 0
    %120 = vmatpush1.bf16.msra.mxu0 %v100
    %121 = vmatprep.subr.bf16.mxu0 0
    %122 = vmatpush1.bf16.msra.mxu0 %v101
    %123 = vmatprep.subr.bf16.mxu0 0
    %124 = vmatpush1.bf16.msra.mxu0 %v102
    %125 = vmatprep.subr.bf16.mxu0 0
    %126 = vmatpush1.bf16.msra.mxu0 %v103
    %127 = vmatprep.subr.bf16.mxu0 0
    %128 = vmatpush1.bf16.msra.mxu0 %v104
    %129 = vmatprep.subr.bf16.mxu0 0
    %130 = vmatpush1.bf16.msra.mxu0 0
    %131 = vmatprep.subr.bf16.mxu0 0
    %132 = vmatpush1.bf16.msra.mxu0 0
    %133 = vmatprep.subr.bf16.mxu0 0
    %134 = vmatpush1.bf16.msra.mxu0 0
    %135 = vmatprep.subr.bf16.mxu0 0
    %136 = vmatpush1.bf16.msra.mxu0 0
    %137 = vmatprep.subr.bf16.mxu0 0
    %138 = vmatpush1.bf16.msra.mxu0 0
    %139 = vmatprep.subr.bf16.mxu0 0
    %140 = vmatpush1.bf16.msra.mxu0 0
    %141 = vmatprep.subr.bf16.mxu0 0
    %142 = vmatpush1.bf16.msra.mxu0 0
    %143 = vmatprep.subr.bf16.mxu0 0
    %144 = vmatpush1.bf16.msra.mxu0 0
    %145 = vmatprep.mubr.bf16.mxu0 0
    %146 = vmatmul.mubr.bf16.gmra.mrb[0].mxu0 %v63
    %v147 = vpop.f32.mrb[0].mxu0
    %v148 = vadd.f32 0.0, %v147
    %v149 = vpop.f32.mrb[0].mxu0
    %v150 = vpop.f32.mrb[0].mxu0
    %v151 = vadd.f32 0.0, %v150
    %v152 = vpop.f32.mrb[0].mxu0
    %153 = vdwg.mxu0
    %v154 = vadd.f32 %v148, %v151
    %v155 = vrot.slane %v154, 4
    %v156 = vadd.f32 %v154, %v155
    %v157 = vrot.slane %v156, 2
    %v158 = vadd.f32 %v156, %v157
    %v159 = vrot.slane %v158, 1
    %v160 = vadd.f32 %v158, %v159
    %v161 = vmul.f32 %v160, 0.125
    %v162 = vlaneseq
    %v163 = vshrl.u32 %v162, 7
    %v164 = vadd.s32 %v163, 8
    %vm165 = vcmp.lt.s32.totalorder %v163, 8
    %vm166 = vcmp.lt.s32.totalorder %v164, 8
    %v167 = vsub.f32 %v148, %v161
    %v168 = vsub.f32 %v151, %v161
    %v169 = vsel %vm165, %v167, 0.0
    %v170 = vsel %vm166, %v168, 0.0
    %v171 = vmul.f32 %v169, %v169
    %v172 = vmul.f32 %v170, %v170
    %v173 = vadd.f32 %v171, %v172
    %v174 = vrot.slane %v173, 4
    %v175 = vadd.f32 %v173, %v174
    %v176 = vrot.slane %v175, 2
    %v177 = vadd.f32 %v175, %v176
    %v178 = vrot.slane %v177, 1
    %v179 = vadd.f32 %v177, %v178
    %v180 = vmul.f32 %v179, 0.125
    %v181 = vadd.f32 %v180, 0.0001
    %v182 = vrsqrt.pop %v181
    %v183 = vmul.f32 %v167, %v182
    %v184 = vmul.f32 %v168, %v182
    %vm185 = vcmp.ge.f32.partialorder %v183, 0.0
    %vm186 = vcmp.ge.f32.partialorder %v184, 0.0
    %v187 = vmul.f32 %v183, 0.01
    %v188 = vmul.f32 %v184, 0.01
    %v189 = vsel %vm185, %v183, %v187
    %v190 = vsel %vm186, %v184, %v188
    %191 = vst [vmem:[#allocation7] sm:$0xff] %v189
    %192 = vst [vmem:[#allocation7 + $0x8] sm:$0xff] %v190
    // Predicated region
    $region18: #{tpu_custom_call.1} parent=1 // pred_check
      _
    $region19: #{tpu_custom_call.1} parent=1 // pred_check_branch
      %194 = sbr.rel (0) target = $region21
    $region20: #{tpu_custom_call.1} parent=1 // pred_region
      %s196 = ssub.s32 256, 256
      %197 = vsyncadd [#allocation4], %s196
      %s198 = sshll.u32 [#allocation7], 4
      %s199 = int_to_ptr.vmem [resolvable:$true] %s198
      %204 = dma.vmem_to_hbm [thread:$0]  %s199, 256, %s2, [#allocation4], 128, 128, 8
    $region21: #{tpu_custom_call.1} parent=1 // pred_fallthru
      _
    // Predicated region
    $region22: #{tpu_custom_call.1} parent=1 // pred_check
      _
    $region23: #{tpu_custom_call.1} parent=1 // pred_check_branch
      %206 = sbr.rel (0) target = $region25
    $region24: #{tpu_custom_call.1} parent=1 // pred_region
      %207 = dma.done [#allocation4], 256
    $region25: #{tpu_custom_call.1} parent=1 // pred_fallthru
      _
    %208 = vsyncpa [#allocation3], 1
    %209 = vsyncpa [#allocation6], 1
    %210 = vsyncpa [#allocation4], 1

</llo_original>
